<compile_context>
chip_gen: v7x
topology: tpu7x:2x2x1
jax: 0.10.0
libtpu: 0.0.40
codegen_flags: <defaults>
</compile_context>

<pallas_src>
import functools

import jax
import jax.numpy as jnp
from jax.experimental import pallas as pl
from jax.experimental.pallas import tpu as pltpu


def _sublane_multiple(dtype) -> int:
    """Row-tile alignment for full-vreg packing of sub-32-bit dtypes."""
    bits = jnp.dtype(dtype).itemsize * 8
    if bits >= 32:
        return 8
    if bits == 16:
        return 16
    return 32


def _rmsnorm_kernel(x_ref, w_ref, o_ref, *, eps: float, inv_dim: float):
    # x_ref: (block_rows, dim), w_ref: (1, dim), o_ref: (block_rows, dim)
    xf = x_ref[...].astype(jnp.float32)                        # x.float()
    ms = jnp.sum(xf * xf, axis=-1, keepdims=True) * inv_dim    # mean(x*x, -1)
    scale = jax.lax.rsqrt(ms + eps)                            # (block_rows, 1)
    # Re-read / re-upcast x so the full-tile f32 copy is not live across the
    # lane reduction (keeps Mosaic scratch small; matters on v7x's 64 MiB VMEM).
    y = (x_ref[...].astype(jnp.float32) * scale).astype(x_ref.dtype)  # .type_as(x)
    o_ref[...] = (y * w_ref[...]).astype(o_ref.dtype)                 # * weight


def rmsnorm(x: jax.Array, weight: jax.Array, eps: float = 1e-5,
            block_rows=None, weight_in_input_dtype: bool = False) -> jax.Array:
    """RMSNorm over the last axis of x; weight has shape (dim,)."""
    orig_shape = x.shape
    dim = orig_shape[-1]
    rows = 1
    for s in orig_shape[:-1]:
        rows *= s

    if weight_in_input_dtype:
        # Optional bandwidth-saving mode (changes PyTorch promotion semantics):
        # bf16 x + f32 weight -> bf16 output instead of f32.
        weight = weight.astype(x.dtype)

    # Output dtype follows PyTorch promotion of (x-typed norm) * weight.
    out_dtype = jnp.promote_types(x.dtype, weight.dtype)
    x_is = jnp.dtype(x.dtype).itemsize
    o_is = jnp.dtype(out_dtype).itemsize
    w_is = jnp.dtype(weight.dtype).itemsize
    sublane = _sublane_multiple(x.dtype)

    # ---- tile-size selection -------------------------------------------------
    auto = block_rows is None
    if auto:
        # ~2 MiB of input per tile saturates the HBM roofline on v5e/v6e/v7x;
        # bigger tiles only burn VMEM (v7x has 64 MiB per TensorCore).
        budget = 2 * 1024 * 1024
        block_rows = max(sublane, budget // max(1, dim * x_is))
        block_rows = min(block_rows, 4096)

    # Align: a multiple of the sublane packing, never larger than the row count.
    # (A block equal to the full rows dim is always legal for tiny inputs.)
    if rows <= sublane:
        block_rows = rows
    else:
        block_rows = max(sublane, (block_rows // sublane) * sublane)
        block_rows = min(block_rows, (rows // sublane) * sublane)

    # Best effort: even grid-step count so v7x's two TensorCores get balanced
    # work (dimension_semantics=("parallel",) shards grid steps across cores).
    steps = pl.cdiv(rows, block_rows)
    if auto and steps > 1 and steps % 2 == 1:
        cand = pl.cdiv(pl.cdiv(rows, steps + 1), sublane) * sublane
        cand = min(max(cand, sublane), block_rows)
        if pl.cdiv(rows, cand) % 2 == 0:
            block_rows = cand
            steps = pl.cdiv(rows, block_rows)

    grid = (steps,)

    x2d = x.reshape(rows, dim)
    w2d = weight.reshape(1, dim)

    cost = pl.CostEstimate(
        flops=5 * rows * dim,
        transcendentals=rows,
        bytes_accessed=rows * dim * (x_is + o_is) + dim * w_is,
    )

    # Double-buffered in/out tiles + weight + ~2 f32 temporaries, with headroom,
    # capped at 40 MiB so it stays safe under v7x's 64 MiB physical VMEM
    # (v5e still needs the explicit limit: its default scoped limit is ~16 MiB).
    tile_bytes = block_rows * dim * (x_is + o_is)
    vmem_need = 2 * tile_bytes + 2 * dim * w_is + 2 * block_rows * dim * 4
    vmem_limit = min(40 * 1024 * 1024,
                     max(16 * 1024 * 1024, int(vmem_need * 1.5)))

    out2d = pl.pallas_call(
        functools.partial(_rmsnorm_kernel, eps=eps, inv_dim=1.0 / dim),
        out_shape=jax.ShapeDtypeStruct((rows, dim), out_dtype),
        grid_spec=pltpu.PrefetchScalarGridSpec(
            num_scalar_prefetch=0,
            grid=grid,
            in_specs=[
                pl.BlockSpec((block_rows, dim), lambda i: (i, 0)),
                # TODO(synk): pipeline_mode=pl.Buffered(1) for the invariant
                # weight block would save dim*w_is of VMEM (negligible).
                pl.BlockSpec((1, dim), lambda i: (0, 0)),
            ],
            out_specs=pl.BlockSpec((block_rows, dim), lambda i: (i, 0)),
        ),
        compiler_params=pltpu.CompilerParams(
            dimension_semantics=("parallel",),
            vmem_limit_bytes=vmem_limit),
        cost_estimate=cost,
    )(x2d, w2d)

    return out2d.reshape(orig_shape)


if __name__ == "__main__":
    eps = 1e-5

    def ref_rmsnorm(x, w, eps):
        xf = x.astype(jnp.float32)
        n = xf * jax.lax.rsqrt(jnp.mean(xf * xf, axis=-1, keepdims=True) + eps)
        return n.astype(x.dtype) * w

    # 1) Module-scale shapes: (batch=2, seq=8, hidden=32), f32, weight = ones
    #    (matches nn.Parameter(torch.ones(dim))).
    key = jax.random.PRNGKey(0)
    x = jax.random.normal(key, (2, 8, 32), dtype=jnp.float32)
    w = jnp.ones((32,), dtype=jnp.float32)
    out = rmsnorm(x, w, eps)
    jax.block_until_ready(out)
    ref = ref_rmsnorm(x, w, eps)
    assert out.shape == ref.shape and out.dtype == ref.dtype
    assert jnp.allclose(out, ref, atol=1e-5, rtol=1e-5)

    # 2) bf16 input, f32 weight, rows not a multiple of the block: exercises the
    #    partial final block path (no host-side padding / slicing).
    k1, k2 = jax.random.split(jax.random.PRNGKey(0))
    x2 = jax.random.normal(k1, (3, 100, 256), dtype=jnp.bfloat16)
    w2 = 1.0 + 0.01 * jnp.arange(256, dtype=jnp.float32)
    out2 = rmsnorm(x2, w2, eps, block_rows=64)
    jax.block_until_ready(out2)
    ref2 = ref_rmsnorm(x2, w2, eps)
    assert out2.shape == ref2.shape and out2.dtype == jnp.float32
    assert jnp.allclose(out2, ref2, atol=2e-2, rtol=2e-2)

    # 3) Odd feature dim (not a multiple of 128): block last dim == full dim, so
    #    no feature-axis padding is needed either.
    x3 = jax.random.normal(k2, (2, 50, 96), dtype=jnp.float32)
    w3 = jnp.full((96,), 0.5, dtype=jnp.float32)
    out3 = rmsnorm(x3, w3, eps)
    jax.block_until_ready(out3)
    ref3 = ref_rmsnorm(x3, w3, eps)
    assert out3.shape == ref3.shape and out3.dtype == ref3.dtype
    assert jnp.allclose(out3, ref3, atol=1e-5, rtol=1e-5)

    print("KERNEL_OK")
</pallas_src>

<mosaic_0001>
module attributes {stable_mosaic.version = 11 : i64} {
  func.func @_rmsnorm_kernel(%arg0: i32, %arg1: memref<16x32xf32, #tpu.memory_space<vmem>>, %arg2: memref<1x32xf32, #tpu.memory_space<vmem>>, %arg3: memref<16x32xf32, #tpu.memory_space<vmem>>) attributes {dimension_semantics = [#tpu.dimension_semantics<parallel>], iteration_bounds = array<i64: 1>, scalar_prefetch = 0 : i64, scratch_operands = 0 : i64, tpu.core_type = #tpu.core_type<tc>, window_params = [{transform_indices = @transform_0, window_bounds = array<i64: 16, 32>}, {pipeline_mode = #tpu.pipeline_mode<synchronous>, transform_indices = @transform_1, window_bounds = array<i64: 1, 32>}, {transform_indices = @transform_2, window_bounds = array<i64: 16, 32>}]} {
    %c0 = arith.constant 0 : index
    %c0_0 = arith.constant 0 : index
    %0 = vector.load %arg1[%c0, %c0_0] : memref<16x32xf32, #tpu.memory_space<vmem>>, vector<16x32xf32>
    %1 = arith.mulf %0, %0 : vector<16x32xf32>
    %cst = arith.constant dense<0.000000e+00> : vector<16xf32>
    %2 = vector.multi_reduction <add>, %1, %cst [1] : vector<16x32xf32> to vector<16xf32>
    %3 = vector.shape_cast %2 : vector<16xf32> to vector<16x1xf32>
    %cst_1 = arith.constant 3.125000e-02 : f32
    %4 = vector.broadcast %cst_1 : f32 to vector<16x1xf32>
    %5 = arith.mulf %3, %4 : vector<16x1xf32>
    %cst_2 = arith.constant 9.99999974E-6 : f32
    %6 = vector.broadcast %cst_2 : f32 to vector<16x1xf32>
    %7 = arith.addf %5, %6 : vector<16x1xf32>
    %8 = math.rsqrt %7 : vector<16x1xf32>
    %c0_3 = arith.constant 0 : index
    %c0_4 = arith.constant 0 : index
    %9 = vector.load %arg1[%c0_3, %c0_4] : memref<16x32xf32, #tpu.memory_space<vmem>>, vector<16x32xf32>
    %10 = vector.broadcast %8 : vector<16x1xf32> to vector<16x32xf32>
    %11 = arith.mulf %9, %10 : vector<16x32xf32>
    %c0_5 = arith.constant 0 : index
    %c0_6 = arith.constant 0 : index
    %12 = vector.load %arg2[%c0_5, %c0_6] : memref<1x32xf32, #tpu.memory_space<vmem>>, vector<1x32xf32>
    %13 = vector.broadcast %12 : vector<1x32xf32> to vector<16x32xf32>
    %14 = arith.mulf %11, %13 : vector<16x32xf32>
    %c0_7 = arith.constant 0 : index
    %c0_8 = arith.constant 0 : index
    %15 = vector.load %arg3[%c0_7, %c0_8] : memref<16x32xf32, #tpu.memory_space<vmem>>, vector<16x32xf32>
    tpu.vector_store %arg3[%c0_7, %c0_8], %14 {strides = array<i32>} : memref<16x32xf32, #tpu.memory_space<vmem>>, vector<16x32xf32>,
    return
  }
  func.func @transform_0(%arg0: i32) -> (i32, i32) {
    %c0_i32 = arith.constant 0 : i32
    %c0_i32_0 = arith.constant 0 : i32
    return %arg0, %c0_i32 : i32, i32
  }
  func.func @transform_1(%arg0: i32) -> (i32, i32) {
    %c0_i32 = arith.constant 0 : i32
    %c0_i32_0 = arith.constant 0 : i32
    %c0_i32_1 = arith.constant 0 : i32
    return %c0_i32, %c0_i32_0 : i32, i32
  }
  func.func @transform_2(%arg0: i32) -> (i32, i32) {
    %c0_i32 = arith.constant 0 : i32
    %c0_i32_0 = arith.constant 0 : i32
    return %arg0, %c0_i32 : i32, i32
  }
}

</mosaic_0001>

<llo_original>
// kernel: tpu_custom_call.1
$region0: #{tpu_custom_call.1}
  #allocation0 [shape = 'u32[]', space=smem, size = 0x4, offset = 0x4, fixed_abs, tag = 'smem constant byte address 0x4 - core index']
  #allocation1 [shape = 'u32[144,128]{1,0:T(1,128)}', space=vmem, size = 0x12000, scoped, tag = 'internal scratch']
  %s0 = inlined_call_operand.hbm [shape: f32[16,32], index: 0, kind: input, shape index: {}]
  %s1 = inlined_call_operand.vmem [shape: f32[1,32], index: 1, kind: input, shape index: {}]
  %s2 = inlined_call_operand.hbm [shape: f32[16,32], index: 2, kind: output, shape index: {}]
  %s3 = sld [smem:[#allocation0]]
  $region22: #{tpu_custom_call.1} parent=0
    _
  %s5 = ssub.s32 1, %s3
  %s6 = scalar_select 0, %s5, %s3
  $region1: #{tpu_custom_call.1} parent=0
    #allocation2 [shape = 'u8[8192]{0}', space=vmem, size = 0x2000, scoped, tag = 'input window, operand 0, single buffered']
    #allocation3 [shape = 's32[1]{0}', space=sflag, size = 0x4, scoped, tag = 'scoped memory for tpu_custom_call.1']
    #allocation4 [shape = 's32[1]{0}', space=sflag, size = 0x4, scoped, tag = 'scoped memory for tpu_custom_call.1']
    #allocation5 [shape = 'u8[8192]{0}', space=vmem, size = 0x2000, scoped, tag = 'output window, operand 0, single buffered']
    %7 = vsyncpa [#allocation3], 0
    %8 = vsyncpa [#allocation4], 0
    // Predicated region
    $region2: #{tpu_custom_call.1} parent=1 // pred_check
      _
    $region3: #{tpu_custom_call.1} parent=1 // pred_check_branch
      %10 = sbr.rel (0) target = $region5
    $region4: #{tpu_custom_call.1} parent=1 // pred_region
      %s12 = ssub.s32 256, 256
      %13 = vsyncadd [#allocation3], %s12
      %s14 = sshll.u32 [#allocation2], 4
      %s15 = int_to_ptr.vmem [resolvable:$true] %s14
      %20 = dma.hbm_to_vmem [thread:$0]  %s0, 256, %s15, [#allocation3], 128, 128, 8
    $region5: #{tpu_custom_call.1} parent=1 // pred_fallthru
      _
    // Predicated region
    $region6: #{tpu_custom_call.1} parent=1 // pred_check
      _
    $region7: #{tpu_custom_call.1} parent=1 // pred_check_branch
      %22 = sbr.rel (0) target = $region9
    $region8: #{tpu_custom_call.1} parent=1 // pred_region
      _
    $region9: #{tpu_custom_call.1} parent=1 // pred_fallthru
      _
    // Predicated region
    $region10: #{tpu_custom_call.1} parent=1 // pred_check
      _
    $region11: #{tpu_custom_call.1} parent=1 // pred_check_branch
      %24 = sbr.rel (0) target = $region13
    $region12: #{tpu_custom_call.1} parent=1 // pred_region
      %25 = dma.done [#allocation3], 256
    $region13: #{tpu_custom_call.1} parent=1 // pred_fallthru
      _
    %v26 = vld [vmem:[#allocation2] sm:$0xff]
    %v27 = vld [vmem:[#allocation2 + $0x8] sm:$0xff]
    %v28 = vmul.f32 %v26, %v26
    %v29 = vmul.f32 %v27, %v27
    %vm30 = vcmask 261120
    %v31 = vsel %vm30, %v28, 0.0
    %32 = vadd.xlane.f32.xlu0 %v31
    %v33 = vpop.xlane.xlu0 %32
    %v34 = vsel %vm30, %v29, 0.0
    %35 = vadd.xlane.f32.xlu0 %v34
    %v36 = vpop.xlane.xlu0 %35
    %v37 = vmul.f32 %v33, 0.03125
    %v38 = vmul.f32 %v36, 0.03125
    %v39 = vadd.f32 %v37, 1e-05
    %v40 = vadd.f32 %v38, 1e-05
    %v41 = vrsqrt.pop %v39
    %v42 = vrsqrt.pop %v40
    %v43 = vmul.f32 %v26, %v41
    %v44 = vmul.f32 %v27, %v42
    %v45 = vld [vmem:[%s1] sm:$0x1]
    %v47 = vlaneseq
    %v48 = vshrl.u32 %v47, 7
    %v49 = vsub.s32 0, %v48
    %v50 = vrot.slane %v45, %v49
    %v52 = vmul.f32 %v43, %v50
    %v53 = vmul.f32 %v44, %v50
    %54 = vst.msk [vmem:[#allocation5] sm:$0xff] %vm30, %v52
    %55 = vst.msk [vmem:[#allocation5 + $0x8] sm:$0xff] %vm30, %v53
    // Predicated region
    $region14: #{tpu_custom_call.1} parent=1 // pred_check
      _
    $region15: #{tpu_custom_call.1} parent=1 // pred_check_branch
      %57 = sbr.rel (0) target = $region17
    $region16: #{tpu_custom_call.1} parent=1 // pred_region
      %s59 = ssub.s32 256, 256
      %60 = vsyncadd [#allocation4], %s59
      %s61 = sshll.u32 [#allocation5], 4
      %s62 = int_to_ptr.vmem [resolvable:$true] %s61
      %67 = dma.vmem_to_hbm [thread:$0]  %s62, 256, %s2, [#allocation4], 128, 128, 8
    $region17: #{tpu_custom_call.1} parent=1 // pred_fallthru
      _
    // Predicated region
    $region18: #{tpu_custom_call.1} parent=1 // pred_check
      _
    $region19: #{tpu_custom_call.1} parent=1 // pred_check_branch
      %69 = sbr.rel (0) target = $region21
    $region20: #{tpu_custom_call.1} parent=1 // pred_region
      %70 = dma.done [#allocation4], 256
    $region21: #{tpu_custom_call.1} parent=1 // pred_fallthru
      _
    %71 = vsyncpa [#allocation3], 1
    %72 = vsyncpa [#allocation4], 1

</llo_original>
